<compile_context>
chip_gen: v5e
topology: v5e:2x2
jax: 0.10.0
libtpu: 0.0.40
codegen_flags: <defaults>
</compile_context>

<pallas_src>
import jax
import jax.numpy as jnp
from jax.experimental import pallas as pl
from jax.experimental.pallas import tpu as pltpu


def _round_up(n, m):
    return ((n + m - 1) // m) * m


def _choose_tiling(B, tb_max):
    """Pick (TB, B_pad, n_tiles): TB multiple of 8, balanced tiles, >=2 tiles
    when the batch allows it (v7x megacore), minimal batch padding waste."""
    B8 = _round_up(B, 8)
    n = max(-(-B8 // tb_max), 2 if B8 >= 16 else 1)
    TB = _round_up(-(-B8 // n), 8)
    return TB, TB * n, n


def mlp_kernel(x_ref, w1_ref, b1_ref, w2_ref, b2_ref, o_ref):
    # x arrives as f32 straight from HBM; cast to bf16 on the VPU (free,
    # the kernel is HBM-bound) right before feeding the MXU.
    x = x_ref[...].astype(w1_ref.dtype)
    # hidden = relu(x @ W1 + b1), f32 accumulator out of the MXU
    h = jnp.dot(x, w1_ref[...], preferred_element_type=jnp.float32)
    h = jnp.maximum(h + b1_ref[...], 0.0)          # bias-add + ReLU in f32
    # out = hidden @ W2 + b2 (hidden cast to bf16 only for the MXU operand)
    o = jnp.dot(h.astype(w2_ref.dtype), w2_ref[...],
                preferred_element_type=jnp.float32)
    o_ref[...] = (o + b2_ref[...]).astype(o_ref.dtype)


def prepare_params(w1, b1, w2, b2):
    """One-time padding/casting of the parameters (invariant across calls)."""
    D, H = w1.shape
    C = w2.shape[1]
    H_pad = _round_up(H, 128)
    C_pad = _round_up(C, 128)
    w1_p = jnp.pad(w1, ((0, 0), (0, H_pad - H))).astype(jnp.bfloat16)  # D kept unpadded
    b1_p = jnp.pad(b1, ((0, 0), (0, H_pad - H))).astype(jnp.float32)
    w2_p = jnp.pad(w2, ((0, H_pad - H), (0, C_pad - C))).astype(jnp.bfloat16)
    b2_p = jnp.pad(b2, ((0, 0), (0, C_pad - C))).astype(jnp.float32)
    return (w1_p, b1_p, w2_p, b2_p, C)


def mlp_forward(x, params, tb_max=1024, out_dtype=jnp.float32):
    w1_p, b1_p, w2_p, b2_p, C = params
    B, D = x.shape
    assert w1_p.shape[0] == D
    H_pad = w1_p.shape[1]
    C_pad = w2_p.shape[1]

    TB, B_pad, n_tiles = _choose_tiling(B, tb_max)

    # Pad only the batch (no-op when B is already a TB multiple). Zero rows
    # are sliced away below; D stays at 784 (cast happens inside the kernel).
    x_p = x if B_pad == B else jnp.pad(x, ((0, B_pad - B), (0, 0)))

    out_p = pl.pallas_call(
        mlp_kernel,
        out_shape=jax.ShapeDtypeStruct((B_pad, C_pad), out_dtype),
        grid=(n_tiles,),
        in_specs=[
            pl.BlockSpec((TB, D), lambda i: (i, 0)),          # x: streamed per tile (f32, unpadded D)
            pl.BlockSpec((D, H_pad), lambda i: (0, 0)),       # w1: VMEM-resident
            pl.BlockSpec((1, H_pad), lambda i: (0, 0)),       # b1: VMEM-resident
            pl.BlockSpec((H_pad, C_pad), lambda i: (0, 0)),   # w2: VMEM-resident
            pl.BlockSpec((1, C_pad), lambda i: (0, 0)),       # b2: VMEM-resident
        ],
        out_specs=pl.BlockSpec((TB, C_pad), lambda i: (i, 0)),
        compiler_params=pltpu.CompilerParams(
            dimension_semantics=("parallel",),
            vmem_limit_bytes=64 << 20),
    )(x_p, w1_p, b1_p, w2_p, b2_p)

    return out_p[:B, :C]


def init_params(key, input_size, hidden, n_classes):
    # Deterministic init mimicking PyTorch's nn.Linear default:
    # U(-1/sqrt(fan_in), 1/sqrt(fan_in)) for both weight and bias.
    k1, k2, k3, k4 = jax.random.split(key, 4)
    bound1 = 1.0 / (input_size ** 0.5)
    bound2 = 1.0 / (hidden ** 0.5)
    w1 = jax.random.uniform(k1, (input_size, hidden), jnp.float32, -bound1, bound1)
    b1 = jax.random.uniform(k2, (1, hidden), jnp.float32, -bound1, bound1)
    w2 = jax.random.uniform(k3, (hidden, n_classes), jnp.float32, -bound2, bound2)
    b2 = jax.random.uniform(k4, (1, n_classes), jnp.float32, -bound2, bound2)
    return w1, b1, w2, b2


if __name__ == "__main__":
    key = jax.random.PRNGKey(0)
    k_x, k_p = jax.random.split(key)

    batch = 64
    input_size = 784   # flattened 28x28 MNIST input, as in the spec
    hidden = 50        # fixed by the module (fc1: input_size -> 50)
    n_classes = 10

    x = jax.random.uniform(k_x, (batch, input_size), jnp.float32)
    w1, b1, w2, b2 = init_params(k_p, input_size, hidden, n_classes)

    # Pad/cast parameters once, reuse across calls.
    params = prepare_params(w1, b1, w2, b2)
    fwd = jax.jit(lambda xx: mlp_forward(xx, params))

    out = jax.block_until_ready(fwd(x))
    assert out.shape == (batch, n_classes)

    # Reference with the same bf16-operand / f32-accumulate recipe (tight check).
    xb, w1b, w2b = (a.astype(jnp.bfloat16) for a in (x, w1, w2))
    h_ref = jnp.maximum(
        jnp.dot(xb, w1b, preferred_element_type=jnp.float32) + b1, 0.0)
    ref_bf16 = jnp.dot(h_ref.astype(jnp.bfloat16), w2b,
                       preferred_element_type=jnp.float32) + b2
    assert jnp.allclose(out, ref_bf16, atol=1e-3, rtol=1e-3)

    # Loose sanity check against the pure f32 PyTorch-equivalent math.
    ref_f32 = jnp.maximum(x @ w1 + b1, 0.0) @ w2 + b2
    assert jnp.allclose(out, ref_f32, atol=5e-2, rtol=5e-2)

    print("KERNEL_OK")
</pallas_src>

<mosaic_0001>
module attributes {stable_mosaic.version = 11 : i64} {
  func.func @mlp_kernel(%arg0: i32, %arg1: memref<32x784xf32, #tpu.memory_space<vmem>>, %arg2: memref<784x128xbf16, #tpu.memory_space<vmem>>, %arg3: memref<1x128xf32, #tpu.memory_space<vmem>>, %arg4: memref<128x128xbf16, #tpu.memory_space<vmem>>, %arg5: memref<1x128xf32, #tpu.memory_space<vmem>>, %arg6: memref<32x128xf32, #tpu.memory_space<vmem>>) attributes {dimension_semantics = [#tpu.dimension_semantics<parallel>], iteration_bounds = array<i64: 2>, scalar_prefetch = 0 : i64, scratch_operands = 0 : i64, tpu.core_type = #tpu.core_type<tc>, window_params = [{transform_indices = @transform_0, window_bounds = array<i64: 32, 784>}, {pipeline_mode = #tpu.pipeline_mode<synchronous>, transform_indices = @transform_1, window_bounds = array<i64: 784, 128>}, {pipeline_mode = #tpu.pipeline_mode<synchronous>, transform_indices = @transform_2, window_bounds = array<i64: 1, 128>}, {pipeline_mode = #tpu.pipeline_mode<synchronous>, transform_indices = @transform_3, window_bounds = array<i64: 128, 128>}, {pipeline_mode = #tpu.pipeline_mode<synchronous>, transform_indices = @transform_4, window_bounds = array<i64: 1, 128>}, {transform_indices = @transform_5, window_bounds = array<i64: 32, 128>}]} {
    %c0 = arith.constant 0 : index
    %c0_0 = arith.constant 0 : index
    %0 = vector.load %arg1[%c0, %c0_0] : memref<32x784xf32, #tpu.memory_space<vmem>>, vector<32x784xf32>
    %1 = arith.truncf %0 : vector<32x784xf32> to vector<32x784xbf16>
    %c0_1 = arith.constant 0 : index
    %c0_2 = arith.constant 0 : index
    %2 = vector.load %arg2[%c0_1, %c0_2] : memref<784x128xbf16, #tpu.memory_space<vmem>>, vector<784x128xbf16>
    %cst = arith.constant dense<0.000000e+00> : vector<32x128xf32>
    %3 = tpu.matmul %1, %2, %cst {dimension_numbers = #tpu.dot_dimension_numbers<[1], [0], [0], [1], [0, 0, 1, 1], [], []>} : vector<32x784xbf16>, vector<784x128xbf16>, vector<32x128xf32> -> vector<32x128xf32>
    %c0_3 = arith.constant 0 : index
    %c0_4 = arith.constant 0 : index
    %4 = vector.load %arg3[%c0_3, %c0_4] : memref<1x128xf32, #tpu.memory_space<vmem>>, vector<1x128xf32>
    %5 = vector.broadcast %4 : vector<1x128xf32> to vector<32x128xf32>
    %6 = arith.addf %3, %5 : vector<32x128xf32>
    %cst_5 = arith.constant 0.000000e+00 : f32
    %7 = vector.broadcast %cst_5 : f32 to vector<32x128xf32>
    %8 = arith.maximumf %6, %7 : vector<32x128xf32>
    %9 = arith.truncf %8 : vector<32x128xf32> to vector<32x128xbf16>
    %c0_6 = arith.constant 0 : index
    %c0_7 = arith.constant 0 : index
    %10 = vector.load %arg4[%c0_6, %c0_7] : memref<128x128xbf16, #tpu.memory_space<vmem>>, vector<128x128xbf16>
    %cst_8 = arith.constant dense<0.000000e+00> : vector<32x128xf32>
    %11 = tpu.matmul %9, %10, %cst_8 {dimension_numbers = #tpu.dot_dimension_numbers<[1], [0], [0], [1], [0, 0, 1, 1], [], []>} : vector<32x128xbf16>, vector<128x128xbf16>, vector<32x128xf32> -> vector<32x128xf32>
    %c0_9 = arith.constant 0 : index
    %c0_10 = arith.constant 0 : index
    %12 = vector.load %arg5[%c0_9, %c0_10] : memref<1x128xf32, #tpu.memory_space<vmem>>, vector<1x128xf32>
    %13 = vector.broadcast %12 : vector<1x128xf32> to vector<32x128xf32>
    %14 = arith.addf %11, %13 : vector<32x128xf32>
    %c0_11 = arith.constant 0 : index
    %c0_12 = arith.constant 0 : index
    %15 = vector.load %arg6[%c0_11, %c0_12] : memref<32x128xf32, #tpu.memory_space<vmem>>, vector<32x128xf32>
    tpu.vector_store %arg6[%c0_11, %c0_12], %14 {strides = array<i32>} : memref<32x128xf32, #tpu.memory_space<vmem>>, vector<32x128xf32>,
    return
  }
  func.func @transform_0(%arg0: i32) -> (i32, i32) {
    %c0_i32 = arith.constant 0 : i32
    %c0_i32_0 = arith.constant 0 : i32
    return %arg0, %c0_i32 : i32, i32
  }
  func.func @transform_1(%arg0: i32) -> (i32, i32) {
    %c0_i32 = arith.constant 0 : i32
    %c0_i32_0 = arith.constant 0 : i32
    %c0_i32_1 = arith.constant 0 : i32
    return %c0_i32, %c0_i32_0 : i32, i32
  }
  func.func @transform_2(%arg0: i32) -> (i32, i32) {
    %c0_i32 = arith.constant 0 : i32
    %c0_i32_0 = arith.constant 0 : i32
    %c0_i32_1 = arith.constant 0 : i32
    return %c0_i32, %c0_i32_0 : i32, i32
  }
  func.func @transform_3(%arg0: i32) -> (i32, i32) {
    %c0_i32 = arith.constant 0 : i32
    %c0_i32_0 = arith.constant 0 : i32
    %c0_i32_1 = arith.constant 0 : i32
    return %c0_i32, %c0_i32_0 : i32, i32
  }
  func.func @transform_4(%arg0: i32) -> (i32, i32) {
    %c0_i32 = arith.constant 0 : i32
    %c0_i32_0 = arith.constant 0 : i32
    %c0_i32_1 = arith.constant 0 : i32
    return %c0_i32, %c0_i32_0 : i32, i32
  }
  func.func @transform_5(%arg0: i32) -> (i32, i32) {
    %c0_i32 = arith.constant 0 : i32
    %c0_i32_0 = arith.constant 0 : i32
    return %arg0, %c0_i32 : i32, i32
  }
}

</mosaic_0001>

<llo_original>
// kernel: _lambda_.1
$region0: #{_lambda_.1}
  #allocation0 [shape = 'u32[]', space=smem, size = 0x4, offset = 0x4, fixed_abs, tag = 'smem constant byte address 0x4 - core index']
  #allocation1 [shape = 'u32[72,128]{1,0:T(1,128)}', space=vmem, size = 0x9000, scoped, tag = 'internal scratch']
  %s0 = inlined_call_operand.hbm [shape: f32[64,784], index: 0, kind: input, shape index: {}]
  %s1 = inlined_call_operand.hbm [shape: bf16[784,128], index: 1, kind: input, shape index: {}]
  %s2 = inlined_call_operand.hbm [shape: f32[1,128], index: 2, kind: input, shape index: {}]
  %s3 = inlined_call_operand.hbm [shape: bf16[128,128], index: 3, kind: input, shape index: {}]
  %s4 = inlined_call_operand.vmem [shape: f32[1,128], index: 4, kind: input, shape index: {}]
  %s5 = inlined_call_operand.vmem [shape: f32[64,128], index: 5, kind: output, shape index: {}]
  %s6 = sld [smem:[#allocation0]]
  $region69: #{_lambda_.1} parent=0
    _
  %s8 = ssub.s32 1, %s6
  %s9 = scalar_select 0, %s8, %s6
  $region1: #{_lambda_.1} parent=0
    #allocation2 [shape = 'u8[229376]{0}', space=vmem, size = 0x38000, scoped, tag = 'input window, operand 0']
    #allocation3 [shape = 's32[2]{0}', space=sflag, size = 0x8, scoped, tag = 'scoped memory for _lambda_.1']
    #allocation4 [shape = 'u8[200704]{0}', space=vmem, size = 0x31000, scoped, tag = 'input window, operand 1, single buffered']
    #allocation5 [shape = 's32[1]{0}', space=sflag, size = 0x4, scoped, tag = 'scoped memory for _lambda_.1']
    #allocation6 [shape = 'u8[512]{0}', space=vmem, size = 0x400, scoped, tag = 'input window, operand 2, single buffered']
    #allocation7 [shape = 'u8[32768]{0}', space=vmem, size = 0x8000, scoped, tag = 'input window, operand 3, single buffered']
    #allocation8 [shape = 's32[1]{0}', space=sflag, size = 0x4, scoped, tag = 'scoped memory for _lambda_.1']
    %10 = vsyncpa [#allocation3], 0
    %s11 = scalar_lea.sflag [#allocation3], 1
    %12 = vsyncpa %s11, 0
    %13 = vsyncpa [#allocation5], 0
    %14 = vsyncpa [#allocation8], 0
    loop: start=0, step=1, limit=4
    $region2: #{_lambda_.1} parent=1 // loop_pre_header
      _
    $region3: #{_lambda_.1} parent=1 // loop_header
      %s16 = sphi 0, %s20
      %p17 = scmp.ge.s32.totalorder %s16, 4
      %s26 = sphi 0, %s28
      %s29 = sphi 0, %s26
      %s30 = sphi 0, %s29
      %s46 = sphi 0, %s30
      %s50 = sphi 0, %s50
      %s52 = sphi 0, %s50
      %s53 = sphi 0, %s52
      %s67 = sphi 0, %s53
      %s71 = sphi 0, %s71
      %s73 = sphi 0, %s71
      %s74 = sphi 0, %s73
      %s88 = sphi 0, %s74
      %s92 = sphi 0, %s92
      %s94 = sphi 0, %s92
      %s95 = sphi 0, %s94
      %s109 = sphi 0, %s95
      %s113 = sphi 0, %s113
      %s115 = sphi 0, %s113
      %s116 = sphi 0, %s115
      %s130 = sphi 0, %s116
      %s136 = sphi 0, %s138
      %s139 = sphi 0, %s136
      %s140 = sphi 0, %s139
      %s156 = sphi 0, %s140
    $region4: #{_lambda_.1} parent=1 // loop_header_branch
      %19 = sbr.rel (%p17) target = $region8
    $region5: #{_lambda_.1} parent=1 // loop_body
      %s21 = ssub.s32 %s16, 1
      %s22 = ssub.s32 %s16, 2
      %s23 = sadd.s32 %s16, 1
      %s24 = ssub.s32 %s16, %s23
      %p25 = scmp.eq.s32.totalorder %s24, 0
      %s27 = sadd.s32 %s26, 1
      %s28 = scalar_select %p25, %s26, %s27
      %p31 = pneg %p25
      %p32 = scmp.eq.s32.totalorder %s16, 1
      %p33 = por %p31, %p32
      %p34 = scmp.ne.s32.totalorder %s26, %s29
      %p35 = scmp.eq.s32.totalorder %s16, 0
      %p36 = por %p34, %p35
      %p37 = scmp.ne.s32.totalorder %s26, %s29
      %p38 = scmp.eq.s32.totalorder %s21, 1
      %p39 = por %p37, %p38
      %p40 = scmp.ne.s32.totalorder %s29, %s30
      %p41 = scmp.eq.s32.totalorder %s21, 0
      %p42 = por %p40, %p41
      %p43 = scmp.ne.s32.totalorder %s29, %s30
      %p44 = scmp.eq.s32.totalorder %s22, 1
      %p45 = por %p43, %p44
      %p47 = scmp.ne.s32.totalorder %s30, %s46
      %p48 = scmp.eq.s32.totalorder %s22, 0
      %p49 = por %p47, %p48
      %s51 = sadd.s32 %s50, 1
      %p54 = scmp.eq.s32.totalorder %s16, 1
      %p55 = scmp.ne.s32.totalorder %s50, %s52
      %p56 = scmp.eq.s32.totalorder %s16, 0
      %p57 = por %p55, %p56
      %p58 = scmp.ne.s32.totalorder %s50, %s52
      %p59 = scmp.eq.s32.totalorder %s21, 1
      %p60 = por %p58, %p59
      %p61 = scmp.ne.s32.totalorder %s52, %s53
      %p62 = scmp.eq.s32.totalorder %s21, 0
      %p63 = por %p61, %p62
      %p64 = scmp.ne.s32.totalorder %s52, %s53
      %p65 = scmp.eq.s32.totalorder %s22, 1
      %p66 = por %p64, %p65
      %p68 = scmp.ne.s32.totalorder %s53, %s67
      %p69 = scmp.eq.s32.totalorder %s22, 0
      %p70 = por %p68, %p69
      %s72 = sadd.s32 %s71, 1
      %p75 = scmp.eq.s32.totalorder %s16, 1
      %p76 = scmp.ne.s32.totalorder %s71, %s73
      %p77 = scmp.eq.s32.totalorder %s16, 0
      %p78 = por %p76, %p77
      %p79 = scmp.ne.s32.totalorder %s71, %s73
      %p80 = scmp.eq.s32.totalorder %s21, 1
      %p81 = por %p79, %p80
      %p82 = scmp.ne.s32.totalorder %s73, %s74
      %p83 = scmp.eq.s32.totalorder %s21, 0
      %p84 = por %p82, %p83
      %p85 = scmp.ne.s32.totalorder %s73, %s74
      %p86 = scmp.eq.s32.totalorder %s22, 1
      %p87 = por %p85, %p86
      %p89 = scmp.ne.s32.totalorder %s74, %s88
      %p90 = scmp.eq.s32.totalorder %s22, 0
      %p91 = por %p89, %p90
      %s93 = sadd.s32 %s92, 1
      %p96 = scmp.eq.s32.totalorder %s16, 1
      %p97 = scmp.ne.s32.totalorder %s92, %s94
      %p98 = scmp.eq.s32.totalorder %s16, 0
      %p99 = por %p97, %p98
      %p100 = scmp.ne.s32.totalorder %s92, %s94
      %p101 = scmp.eq.s32.totalorder %s21, 1
      %p102 = por %p100, %p101
      %p103 = scmp.ne.s32.totalorder %s94, %s95
      %p104 = scmp.eq.s32.totalorder %s21, 0
      %p105 = por %p103, %p104
      %p106 = scmp.ne.s32.totalorder %s94, %s95
      %p107 = scmp.eq.s32.totalorder %s22, 1
      %p108 = por %p106, %p107
      %p110 = scmp.ne.s32.totalorder %s95, %s109
      %p111 = scmp.eq.s32.totalorder %s22, 0
      %p112 = por %p110, %p111
      %s114 = sadd.s32 %s113, 1
      %p117 = scmp.eq.s32.totalorder %s16, 1
      %p118 = scmp.ne.s32.totalorder %s113, %s115
      %p119 = scmp.eq.s32.totalorder %s16, 0
      %p120 = por %p118, %p119
      %p121 = scmp.ne.s32.totalorder %s113, %s115
      %p122 = scmp.eq.s32.totalorder %s21, 1
      %p123 = por %p121, %p122
      %p124 = scmp.ne.s32.totalorder %s115, %s116
      %p125 = scmp.eq.s32.totalorder %s21, 0
      %p126 = por %p124, %p125
      %p127 = scmp.ne.s32.totalorder %s115, %s116
      %p128 = scmp.eq.s32.totalorder %s22, 1
      %p129 = por %p127, %p128
      %p131 = scmp.ne.s32.totalorder %s116, %s130
      %p132 = scmp.eq.s32.totalorder %s22, 0
      %p133 = por %p131, %p132
      %s134 = ssub.s32 %s16, %s23
      %p135 = scmp.eq.s32.totalorder %s134, 0
      %s137 = sadd.s32 %s136, 1
      %s138 = scalar_select %p135, %s136, %s137
      %p141 = pneg %p135
      %p142 = scmp.eq.s32.totalorder %s16, 1
      %p143 = por %p141, %p142
      %p144 = scmp.ne.s32.totalorder %s136, %s139
      %p145 = scmp.eq.s32.totalorder %s16, 0
      %p146 = por %p144, %p145
      %p147 = scmp.ne.s32.totalorder %s136, %s139
      %p148 = scmp.eq.s32.totalorder %s21, 1
      %p149 = por %p147, %p148
      %p150 = scmp.ne.s32.totalorder %s139, %s140
      %p151 = scmp.eq.s32.totalorder %s21, 0
      %p152 = por %p150, %p151
      %p153 = scmp.ne.s32.totalorder %s139, %s140
      %p154 = scmp.eq.s32.totalorder %s22, 1
      %p155 = por %p153, %p154
      %p157 = scmp.ne.s32.totalorder %s140, %s156
      %p158 = scmp.eq.s32.totalorder %s22, 0
      %p159 = por %p157, %p158
      %p160 = scmp.le.s32.totalorder 1, %s16
      %p161 = scmp.lt.s32.totalorder %s16, 3
      %p162 = pnand %p160, %p161
      %p163 = pneg %p162
      // Predicated region
      $region9: #{_lambda_.1} parent=5 // pred_check
        _
      $region10: #{_lambda_.1} parent=5 // pred_check_branch
        %165 = sbr.rel (%p162) target = $region12
      $region11: #{_lambda_.1} parent=5 // pred_region
        %s166 = ssub.s32 %s16, 1
        // Predicated region
        $region13: #{_lambda_.1} parent=11 // pred_check
          %p167 = pneg %p63
        $region14: #{_lambda_.1} parent=11 // pred_check_branch
          %169 = sbr.rel (%p167) target = $region16
        $region15: #{_lambda_.1} parent=11 // pred_region
          %171 = vsyncadd [#allocation5], 0
          %s172 = sshll.u32 %s1, 4
          %s173 = int_to_ptr.hbm [resolvable:$true] %s172
          %s174 = sshll.u32 [#allocation4], 4
          %s175 = int_to_ptr.vmem [resolvable:$true] %s174
          %180 = dma.hbm_to_vmem [thread:$0]  %s173, 6272, %s175, [#allocation5], 64, 64, 4
        $region16: #{_lambda_.1} parent=11 // pred_fallthru
          _
        // Predicated region
        $region17: #{_lambda_.1} parent=11 // pred_check
          %p181 = pneg %p84
        $region18: #{_lambda_.1} parent=11 // pred_check_branch
          %183 = sbr.rel (%p181) target = $region20
        $region19: #{_lambda_.1} parent=11 // pred_region
          %185 = vsyncadd [#allocation5], 0
          %s187 = sshll.u32 %s2, 4
          %s188 = int_to_ptr.hbm [resolvable:$true] %s187
          %s189 = sshll.u32 [#allocation6], 4
          %s190 = int_to_ptr.vmem [resolvable:$true] %s189
          %192 = dma.hbm_to_vmem [thread:$0]  %s188, 16, %s190, [#allocation5]
        $region20: #{_lambda_.1} parent=11 // pred_fallthru
          _
        // Predicated region
        $region21: #{_lambda_.1} parent=11 // pred_check
          %p193 = pneg %p105
        $region22: #{_lambda_.1} parent=11 // pred_check_branch
          %195 = sbr.rel (%p193) target = $region24
        $region23: #{_lambda_.1} parent=11 // pred_region
          %197 = vsyncadd [#allocation8], 0
          %s198 = sshll.u32 %s3, 4
          %s199 = int_to_ptr.hbm [resolvable:$true] %s198
          %s200 = sshll.u32 [#allocation7], 4
          %s201 = int_to_ptr.vmem [resolvable:$true] %s200
          %206 = dma.hbm_to_vmem [thread:$0]  %s199, 1024, %s201, [#allocation8], 64, 64, 4
        $region24: #{_lambda_.1} parent=11 // pred_fallthru
          _
        // Predicated region
        $region25: #{_lambda_.1} parent=11 // pred_check
          %p207 = pneg %p126
        $region26: #{_lambda_.1} parent=11 // pred_check_branch
          %209 = sbr.rel (%p207) target = $region28
        $region27: #{_lambda_.1} parent=11 // pred_region
          _
        $region28: #{_lambda_.1} parent=11 // pred_fallthru
          _
      $region12: #{_lambda_.1} parent=5 // pred_fallthru
        _
      %p210 = scmp.lt.s32.totalorder %s16, 2
      // Predicated region
      $region29: #{_lambda_.1} parent=5 // pred_check
        %p211 = pneg %p210
      $region30: #{_lambda_.1} parent=5 // pred_check_branch
        %213 = sbr.rel (%p211) target = $region32
      $region31: #{_lambda_.1} parent=5 // pred_region
        // Predicated region
        $region33: #{_lambda_.1} parent=31 // pred_check
          %p214 = pneg %p36
        $region34: #{_lambda_.1} parent=31 // pred_check_branch
          %216 = sbr.rel (%p214) target = $region36
        $region35: #{_lambda_.1} parent=31 // pred_region
          %s217 = sand.u32 %s26, 1
          %s218 = scalar_lea.sflag [#allocation3], %s217
          %s219 = sand.u32 %s26, 1
          %s220 = smul.addr %s219, 224
          %s221 = scalar_lea.vmem [#allocation2], %s220
          %s222 = smul.u32 4, %s16
          %224 = vsyncadd %s218, 0
          %s225 = smul.addr %s222, 7
          %s226 = smul.addr %s225, 8
          %s227 = scalar_lea.hbm %s0, %s226
          %s228 = sshll.u32 %s227, 4
          %s229 = int_to_ptr.hbm [resolvable:$true] %s228
          %s230 = sshll.u32 %s221, 4
          %s231 = int_to_ptr.vmem [resolvable:$true] %s230
          %236 = dma.hbm_to_vmem [thread:$0]  %s229, 3584, %s231, %s218, 896, 896, 56
        $region36: #{_lambda_.1} parent=31 // pred_fallthru
          _
      $region32: #{_lambda_.1} parent=5 // pred_fallthru
        _
      %p237 = scmp.le.s32.totalorder 1, %s16
      %p238 = scmp.lt.s32.totalorder %s16, 3
      %p239 = pnand %p237, %p238
      %p240 = pneg %p239
      // Predicated region
      $region37: #{_lambda_.1} parent=5 // pred_check
        _
      $region38: #{_lambda_.1} parent=5 // pred_check_branch
        %242 = sbr.rel (%p239) target = $region40
      $region39: #{_lambda_.1} parent=5 // pred_region
        %s243 = ssub.s32 %s16, 1
        %s244 = sand.u32 %s29, 1
        %s245 = scalar_lea.sflag [#allocation3], %s244
        %s246 = sand.u32 %s29, 1
        %s247 = smul.addr %s246, 224
        %s248 = scalar_lea.vmem [#allocation2], %s247
        // Predicated region
        $region41: #{_lambda_.1} parent=39 // pred_check
          %p249 = pneg %p42
        $region42: #{_lambda_.1} parent=39 // pred_check_branch
          %251 = sbr.rel (%p249) target = $region44
        $region43: #{_lambda_.1} parent=39 // pred_region
          %253 = dma.done %s245, 3584
        $region44: #{_lambda_.1} parent=39 // pred_fallthru
          _
        // Predicated region
        $region45: #{_lambda_.1} parent=39 // pred_check
          %p254 = pneg %p63
        $region46: #{_lambda_.1} parent=39 // pred_check_branch
          %256 = sbr.rel (%p254) target = $region48
        $region47: #{_lambda_.1} parent=39 // pred_region
          %258 = dma.done [#allocation5], 6272
        $region48: #{_lambda_.1} parent=39 // pred_fallthru
          _
        // Predicated region
        $region49: #{_lambda_.1} parent=39 // pred_check
          %p259 = pneg %p84
        $region50: #{_lambda_.1} parent=39 // pred_check_branch
          %261 = sbr.rel (%p259) target = $region52
        $region51: #{_lambda_.1} parent=39 // pred_region
          %263 = dma.done [#allocation5], 16
        $region52: #{_lambda_.1} parent=39 // pred_fallthru
          _
        // Predicated region
        $region53: #{_lambda_.1} parent=39 // pred_check
          %p264 = pneg %p105
        $region54: #{_lambda_.1} parent=39 // pred_check_branch
          %266 = sbr.rel (%p264) target = $region56
        $region55: #{_lambda_.1} parent=39 // pred_region
          %268 = dma.done [#allocation8], 1024
        $region56: #{_lambda_.1} parent=39 // pred_fallthru
          _
        %s269 = sand.u32 %s29, 1
        %s270 = scalar_lea.sflag [#allocation3], %s269
        %s271 = sand.u32 %s29, 1
        %s272 = smul.addr %s271, 224
        %s273 = scalar_lea.vmem [#allocation2], %s272
        %p274 = pneg %p42
        %p275 = pneg %p39
        %p276 = pneg %p63
        %p277 = pneg %p60
        %p278 = pneg %p84
        %p279 = pneg %p81
        %p280 = pneg %p105
        %p281 = pneg %p102
        %p282 = pneg %p126
        %p283 = pneg %p123
        %p284 = pneg %p152
        %p285 = pneg %p149
        %s286 = smul.u32 4, %s21
        %p287 = scmp.lt.s32.totalorder %s286, 7
        %s288 = scalar_select %p287, %s286, 7
        %s289 = smul.addr %s288, 8
        %s290 = scalar_lea.vmem %s5, %s289
        %s291 = smul.u32 4, %s21
        %s292 = smul.u32 4, %s21
        %p293 = scmp.lt.s32.totalorder %s292, 7
        %s294 = scalar_select %p293, %s292, 7
        %s295 = smul.addr %s294, 8
        %s296 = scalar_lea.vmem %s5, %s295
        %s297 = smul.u32 4, %s21
        %v299 = vld [vmem:[%s248] sm:$0xff]
        %v300 = vld [vmem:[%s248 + $0x8] sm:$0xff]
        %v301 = vld [vmem:[%s248 + $0x10] sm:$0xff]
        %v302 = vld [vmem:[%s248 + $0x18] sm:$0xff]
        %v303 = vld [vmem:[%s248 + $0x20] sm:$0xff]
        %v304 = vld [vmem:[%s248 + $0x28] sm:$0xff]
        %v305 = vld [vmem:[%s248 + $0x30] sm:$0xff]
        %v306 = vld [vmem:[%s248 + $0x38] sm:$0xff]
        %v307 = vld [vmem:[%s248 + $0x40] sm:$0xff]
        %v308 = vld [vmem:[%s248 + $0x48] sm:$0xff]
        %v309 = vld [vmem:[%s248 + $0x50] sm:$0xff]
        %v310 = vld [vmem:[%s248 + $0x58] sm:$0xff]
        %v311 = vld [vmem:[%s248 + $0x60] sm:$0xff]
        %v312 = vld [vmem:[%s248 + $0x68] sm:$0xff]
        %v313 = vld [vmem:[%s248 + $0x70] sm:$0xff]
        %v314 = vld [vmem:[%s248 + $0x78] sm:$0xff]
        %v315 = vld [vmem:[%s248 + $0x80] sm:$0xff]
        %v316 = vld [vmem:[%s248 + $0x88] sm:$0xff]
        %v317 = vld [vmem:[%s248 + $0x90] sm:$0xff]
        %v318 = vld [vmem:[%s248 + $0x98] sm:$0xff]
        %v319 = vld [vmem:[%s248 + $0xa0] sm:$0xff]
        %v320 = vld [vmem:[%s248 + $0xa8] sm:$0xff]
        %v321 = vld [vmem:[%s248 + $0xb0] sm:$0xff]
        %v322 = vld [vmem:[%s248 + $0xb8] sm:$0xff]
        %v323 = vld [vmem:[%s248 + $0xc0] sm:$0xff]
        %v324 = vld [vmem:[%s248 + $0xc8] sm:$0xff]
        %v325 = vld [vmem:[%s248 + $0xd0] sm:$0xff]
        %v326 = vld [vmem:[%s248 + $0xd8] sm:$0xff]
        %v327 = vpack.c.bf16 %v306, %v299
        %v328 = vpack.c.bf16 %v307, %v300
        %v329 = vpack.c.bf16 %v308, %v301
        %v330 = vpack.c.bf16 %v309, %v302
        %v331 = vpack.c.bf16 %v310, %v303
        %v332 = vpack.c.bf16 %v311, %v304
        %v333 = vpack.c.bf16 %v312, %v305
        %v334 = vpack.c.bf16 %v320, %v313
        %v335 = vpack.c.bf16 %v321, %v314
        %v336 = vpack.c.bf16 %v322, %v315
        %v337 = vpack.c.bf16 %v323, %v316
        %v338 = vpack.c.bf16 %v324, %v317
        %v339 = vpack.c.bf16 %v325, %v318
        %v340 = vpack.c.bf16 %v326, %v319
        %v341 = vld [vmem:[#allocation4] sm:$0xf]
        %v342 = vld [vmem:[#allocation4 + $0x4] sm:$0xf]
        %v343 = vld [vmem:[#allocation4 + $0x8] sm:$0xf]
        %v344 = vld [vmem:[#allocation4 + $0xc] sm:$0xf]
        %v345 = vld [vmem:[#allocation4 + $0x10] sm:$0xf]
        %v346 = vld [vmem:[#allocation4 + $0x14] sm:$0xf]
        %v347 = vld [vmem:[#allocation4 + $0x18] sm:$0xf]
        %v348 = vld [vmem:[#allocation4 + $0x1c] sm:$0xf]
        %v349 = vld [vmem:[#allocation4 + $0x20] sm:$0xf]
        %v350 = vld [vmem:[#allocation4 + $0x24] sm:$0xf]
        %v351 = vld [vmem:[#allocation4 + $0x28] sm:$0xf]
        %v352 = vld [vmem:[#allocation4 + $0x2c] sm:$0xf]
        %v353 = vld [vmem:[#allocation4 + $0x30] sm:$0xf]
        %v354 = vld [vmem:[#allocation4 + $0x34] sm:$0xf]
        %v355 = vld [vmem:[#allocation4 + $0x38] sm:$0xf]
        %v356 = vld [vmem:[#allocation4 + $0x3c] sm:$0xf]
        %v357 = vld [vmem:[#allocation4 + $0x40] sm:$0xf]
        %v358 = vld [vmem:[#allocation4 + $0x44] sm:$0xf]
        %v359 = vld [vmem:[#allocation4 + $0x48] sm:$0xf]
        %v360 = vld [vmem:[#allocation4 + $0x4c] sm:$0xf]
        %v361 = vld [vmem:[#allocation4 + $0x50] sm:$0xf]
        %v362 = vld [vmem:[#allocation4 + $0x54] sm:$0xf]
        %v363 = vld [vmem:[#allocation4 + $0x58] sm:$0xf]
        %v364 = vld [vmem:[#allocation4 + $0x5c] sm:$0xf]
        %v365 = vld [vmem:[#allocation4 + $0x60] sm:$0xf]
        %v366 = vld [vmem:[#allocation4 + $0x64] sm:$0xf]
        %v367 = vld [vmem:[#allocation4 + $0x68] sm:$0xf]
        %v368 = vld [vmem:[#allocation4 + $0x6c] sm:$0xf]
        %v369 = vld [vmem:[#allocation4 + $0x70] sm:$0xf]
        %v370 = vld [vmem:[#allocation4 + $0x74] sm:$0xf]
        %v371 = vld [vmem:[#allocation4 + $0x78] sm:$0xf]
        %v372 = vld [vmem:[#allocation4 + $0x7c] sm:$0xf]
        %v373 = vld [vmem:[#allocation4 + $0x80] sm:$0xf]
        %v374 = vld [vmem:[#allocation4 + $0x84] sm:$0xf]
        %v375 = vld [vmem:[#allocation4 + $0x88] sm:$0xf]
        %v376 = vld [vmem:[#allocation4 + $0x8c] sm:$0xf]
        %v377 = vld [vmem:[#allocation4 + $0x90] sm:$0xf]
        %v378 = vld [vmem:[#allocation4 + $0x94] sm:$0xf]
        %v379 = vld [vmem:[#allocation4 + $0x98] sm:$0xf]
        %v380 = vld [vmem:[#allocation4 + $0x9c] sm:$0xf]
        %v381 = vld [vmem:[#allocation4 + $0xa0] sm:$0xf]
        %v382 = vld [vmem:[#allocation4 + $0xa4] sm:$0xf]
        %v383 = vld [vmem:[#allocation4 + $0xa8] sm:$0xf]
        %v384 = vld [vmem:[#allocation4 + $0xac] sm:$0xf]
        %v385 = vld [vmem:[#allocation4 + $0xb0] sm:$0xf]
        %v386 = vld [vmem:[#allocation4 + $0xb4] sm:$0xf]
        %v387 = vld [vmem:[#allocation4 + $0xb8] sm:$0xf]
        %v388 = vld [vmem:[#allocation4 + $0xbc] sm:$0xf]
        %v389 = vld [vmem:[#allocation4 + $0xc0] sm:$0xf]
        %v390 = vld [vmem:[#allocation4 + $0xc4] sm:$0xf]
        %v391 = vld [vmem:[#allocation4 + $0xc8] sm:$0xf]
        %v392 = vld [vmem:[#allocation4 + $0xcc] sm:$0xf]
        %v393 = vld [vmem:[#allocation4 + $0xd0] sm:$0xf]
        %v394 = vld [vmem:[#allocation4 + $0xd4] sm:$0xf]
        %v395 = vld [vmem:[#allocation4 + $0xd8] sm:$0xf]
        %v396 = vld [vmem:[#allocation4 + $0xdc] sm:$0xf]
        %v397 = vld [vmem:[#allocation4 + $0xe0] sm:$0xf]
        %v398 = vld [vmem:[#allocation4 + $0xe4] sm:$0xf]
        %v399 = vld [vmem:[#allocation4 + $0xe8] sm:$0xf]
        %v400 = vld [vmem:[#allocation4 + $0xec] sm:$0xf]
        %v401 = vld [vmem:[#allocation4 + $0xf0] sm:$0xf]
        %v402 = vld [vmem:[#allocation4 + $0xf4] sm:$0xf]
        %v403 = vld [vmem:[#allocation4 + $0xf8] sm:$0xf]
        %v404 = vld [vmem:[#allocation4 + $0xfc] sm:$0xf]
        %v405 = vld [vmem:[#allocation4 + $0x100] sm:$0xf]
        %v406 = vld [vmem:[#allocation4 + $0x104] sm:$0xf]
        %v407 = vld [vmem:[#allocation4 + $0x108] sm:$0xf]
        %v408 = vld [vmem:[#allocation4 + $0x10c] sm:$0xf]
        %v409 = vld [vmem:[#allocation4 + $0x110] sm:$0xf]
        %v410 = vld [vmem:[#allocation4 + $0x114] sm:$0xf]
        %v411 = vld [vmem:[#allocation4 + $0x118] sm:$0xf]
        %v412 = vld [vmem:[#allocation4 + $0x11c] sm:$0xf]
        %v413 = vld [vmem:[#allocation4 + $0x120] sm:$0xf]
        %v414 = vld [vmem:[#allocation4 + $0x124] sm:$0xf]
        %v415 = vld [vmem:[#allocation4 + $0x128] sm:$0xf]
        %v416 = vld [vmem:[#allocation4 + $0x12c] sm:$0xf]
        %v417 = vld [vmem:[#allocation4 + $0x130] sm:$0xf]
        %v418 = vld [vmem:[#allocation4 + $0x134] sm:$0xf]
        %v419 = vld [vmem:[#allocation4 + $0x138] sm:$0xf]
        %v420 = vld [vmem:[#allocation4 + $0x13c] sm:$0xf]
        %v421 = vld [vmem:[#allocation4 + $0x140] sm:$0xf]
        %v422 = vld [vmem:[#allocation4 + $0x144] sm:$0xf]
        %v423 = vld [vmem:[#allocation4 + $0x148] sm:$0xf]
        %v424 = vld [vmem:[#allocation4 + $0x14c] sm:$0xf]
        %v425 = vld [vmem:[#allocation4 + $0x150] sm:$0xf]
        %v426 = vld [vmem:[#allocation4 + $0x154] sm:$0xf]
        %v427 = vld [vmem:[#allocation4 + $0x158] sm:$0xf]
        %v428 = vld [vmem:[#allocation4 + $0x15c] sm:$0xf]
        %v429 = vld [vmem:[#allocation4 + $0x160] sm:$0xf]
        %v430 = vld [vmem:[#allocation4 + $0x164] sm:$0xf]
        %v431 = vld [vmem:[#allocation4 + $0x168] sm:$0xf]
        %v432 = vld [vmem:[#allocation4 + $0x16c] sm:$0xf]
        %v433 = vld [vmem:[#allocation4 + $0x170] sm:$0xf]
        %v434 = vld [vmem:[#allocation4 + $0x174] sm:$0xf]
        %v435 = vld [vmem:[#allocation4 + $0x178] sm:$0xf]
        %v436 = vld [vmem:[#allocation4 + $0x17c] sm:$0xf]
        %v437 = vld [vmem:[#allocation4 + $0x180] sm:$0xf]
        %v438 = vld [vmem:[#allocation4 + $0x184] sm:$0xf]
        %v439 = vld [vmem:[#allocation6] sm:$0x1]
        %v441 = vperm.slane %v439, 0
        %v541 = vunpack.c.l.b16 %v341
        %v542 = vunpack.c.l.b16 %v342
        %v543 = vunpack.c.l.b16 %v343
        %v544 = vunpack.c.l.b16 %v344
        %v545 = vunpack.c.l.b16 %v345
        %v546 = vunpack.c.l.b16 %v346
        %v547 = vunpack.c.l.b16 %v347
        %v548 = vunpack.c.l.b16 %v348
        %v549 = vunpack.c.l.b16 %v349
        %v550 = vunpack.c.l.b16 %v350
        %v551 = vunpack.c.l.b16 %v351
        %v552 = vunpack.c.l.b16 %v352
        %v553 = vunpack.c.l.b16 %v353
        %v554 = vunpack.c.l.b16 %v354
        %v555 = vunpack.c.l.b16 %v355
        %v556 = vunpack.c.l.b16 %v356
        %v557 = vunpack.c.l.b16 %v357
        %v558 = vunpack.c.l.b16 %v358
        %v559 = vunpack.c.l.b16 %v359
        %v560 = vunpack.c.l.b16 %v360
        %v561 = vunpack.c.l.b16 %v361
        %v562 = vunpack.c.l.b16 %v362
        %v563 = vunpack.c.l.b16 %v363
        %v564 = vunpack.c.l.b16 %v364
        %v565 = vunpack.c.l.b16 %v365
        %v566 = vunpack.c.l.b16 %v366
        %v567 = vunpack.c.l.b16 %v367
        %v568 = vunpack.c.l.b16 %v368
        %v569 = vunpack.c.l.b16 %v369
        %v570 = vunpack.c.l.b16 %v370
        %v571 = vunpack.c.l.b16 %v371
        %v572 = vunpack.c.l.b16 %v372
        %v573 = vunpack.c.l.b16 %v373
        %v574 = vunpack.c.l.b16 %v374
        %v575 = vunpack.c.l.b16 %v375
        %v576 = vunpack.c.l.b16 %v376
        %v577 = vunpack.c.l.b16 %v377
        %v578 = vunpack.c.l.b16 %v378
        %v579 = vunpack.c.l.b16 %v379
        %v580 = vunpack.c.l.b16 %v380
        %v581 = vunpack.c.l.b16 %v381
        %v582 = vunpack.c.l.b16 %v382
        %v583 = vunpack.c.l.b16 %v383
        %v584 = vunpack.c.l.b16 %v384
        %v585 = vunpack.c.l.b16 %v385
        %v586 = vunpack.c.l.b16 %v386
        %v587 = vunpack.c.l.b16 %v387
        %v588 = vunpack.c.l.b16 %v388
        %v589 = vunpack.c.l.b16 %v389
        %v590 = vunpack.c.l.b16 %v390
        %v591 = vunpack.c.l.b16 %v391
        %v592 = vunpack.c.l.b16 %v392
        %v593 = vunpack.c.l.b16 %v393
        %v594 = vunpack.c.l.b16 %v394
        %v595 = vunpack.c.l.b16 %v395
        %v596 = vunpack.c.l.b16 %v396
        %v597 = vunpack.c.l.b16 %v397
        %v598 = vunpack.c.l.b16 %v398
        %v599 = vunpack.c.l.b16 %v399
        %v600 = vunpack.c.l.b16 %v400
        %v601 = vunpack.c.l.b16 %v401
        %v602 = vunpack.c.l.b16 %v402
        %v603 = vunpack.c.l.b16 %v403
        %v604 = vunpack.c.l.b16 %v404
        %v605 = vunpack.c.l.b16 %v405
        %v606 = vunpack.c.l.b16 %v406
        %v607 = vunpack.c.l.b16 %v407
        %v608 = vunpack.c.l.b16 %v408
        %v609 = vunpack.c.l.b16 %v409
        %v610 = vunpack.c.l.b16 %v410
        %v611 = vunpack.c.l.b16 %v411
        %v612 = vunpack.c.l.b16 %v412
        %v613 = vunpack.c.l.b16 %v413
        %v614 = vunpack.c.l.b16 %v414
        %v615 = vunpack.c.l.b16 %v415
        %v616 = vunpack.c.l.b16 %v416
        %v617 = vunpack.c.l.b16 %v417
        %v618 = vunpack.c.l.b16 %v418
        %v619 = vunpack.c.l.b16 %v419
        %v620 = vunpack.c.l.b16 %v420
        %v621 = vunpack.c.l.b16 %v421
        %v622 = vunpack.c.l.b16 %v422
        %v623 = vunpack.c.l.b16 %v423
        %v624 = vunpack.c.l.b16 %v424
        %v625 = vunpack.c.l.b16 %v425
        %v626 = vunpack.c.l.b16 %v426
        %v627 = vunpack.c.l.b16 %v427
        %v628 = vunpack.c.l.b16 %v428
        %v629 = vunpack.c.l.b16 %v429
        %v630 = vunpack.c.l.b16 %v430
        %v631 = vunpack.c.l.b16 %v431
        %v632 = vunpack.c.l.b16 %v432
        %v633 = vunpack.c.l.b16 %v433
        %v634 = vunpack.c.l.b16 %v434
        %v635 = vunpack.c.l.b16 %v435
        %v636 = vunpack.c.l.b16 %v436
        %v637 = vunpack.c.l.b16 %v437
        %v638 = vunpack.c.l.b16 %v438
        %v639 = vpack.c.b16 %v542, %v541
        %v640 = vpack.c.b16 %v544, %v543
        %v641 = vpack.c.b16 %v546, %v545
        %v642 = vpack.c.b16 %v548, %v547
        %v643 = vpack.c.b16 %v550, %v549
        %v644 = vpack.c.b16 %v552, %v551
        %v645 = vpack.c.b16 %v554, %v553
        %v646 = vpack.c.b16 %v556, %v555
        %v647 = vpack.c.b16 %v558, %v557
        %v648 = vpack.c.b16 %v560, %v559
        %v649 = vpack.c.b16 %v562, %v561
        %v650 = vpack.c.b16 %v564, %v563
        %v651 = vpack.c.b16 %v566, %v565
        %v652 = vpack.c.b16 %v568, %v567
        %v653 = vpack.c.b16 %v570, %v569
        %v654 = vpack.c.b16 %v572, %v571
        %v655 = vpack.c.b16 %v574, %v573
        %v656 = vpack.c.b16 %v576, %v575
        %v657 = vpack.c.b16 %v578, %v577
        %v658 = vpack.c.b16 %v580, %v579
        %v659 = vpack.c.b16 %v582, %v581
        %v660 = vpack.c.b16 %v584, %v583
        %v661 = vpack.c.b16 %v586, %v585
        %v662 = vpack.c.b16 %v588, %v587
        %v663 = vpack.c.b16 %v590, %v589
        %v664 = vpack.c.b16 %v592, %v591
        %v665 = vpack.c.b16 %v594, %v593
        %v666 = vpack.c.b16 %v596, %v595
        %v667 = vpack.c.b16 %v598, %v597
        %v668 = vpack.c.b16 %v600, %v599
        %v669 = vpack.c.b16 %v602, %v601
        %v670 = vpack.c.b16 %v604, %v603
        %v671 = vpack.c.b16 %v606, %v605
        %v672 = vpack.c.b16 %v608, %v607
        %v673 = vpack.c.b16 %v610, %v609
        %v674 = vpack.c.b16 %v612, %v611
        %v675 = vpack.c.b16 %v614, %v613
        %v676 = vpack.c.b16 %v616, %v615
        %v677 = vpack.c.b16 %v618, %v617
        %v678 = vpack.c.b16 %v620, %v619
        %v679 = vpack.c.b16 %v622, %v621
        %v680 = vpack.c.b16 %v624, %v623
        %v681 = vpack.c.b16 %v626, %v625
        %v682 = vpack.c.b16 %v628, %v627
        %v683 = vpack.c.b16 %v630, %v629
        %v684 = vpack.c.b16 %v632, %v631
        %v685 = vpack.c.b16 %v634, %v633
        %v686 = vpack.c.b16 %v636, %v635
        %v687 = vpack.c.b16 %v638, %v637
        %vm737 = vcmask 130048
        %v739 = vsel %vm737, %v333, 0
        %v742 = vsel %vm737, %v340, 0
        %744 = vmatpush.bf16.msra.mxu0 %v646
        %745 = vmatpush.bf16.msra.mxu0 %v645
        %746 = vmatpush.bf16.msra.mxu0 %v644
        %747 = vmatpush.bf16.msra.mxu0 %v643
        %748 = vmatpush.bf16.msra.mxu0 %v642
        %749 = vmatpush.bf16.msra.mxu0 %v641
        %750 = vmatpush.bf16.msra.mxu0 %v640
        %751 = vmatpush.bf16.msra.mxu0 %v639
        %752 = vmatmul.bf16.gmra.mxu0 %v327
        %v753 = vpop.f32.mrf.mxu0
        %v754 = vadd.f32 %v441, %v753
        %v755 = vpop.f32.mrf.mxu0
        %v756 = vadd.f32 %v441, %v755
        %757 = vmatmul.bf16.gmra.mxu0 %v334
        %v758 = vpop.f32.mrf.mxu0
        %v759 = vadd.f32 %v441, %v758
        %v760 = vpop.f32.mrf.mxu0
        %v761 = vadd.f32 %v441, %v760
        %762 = vdwg.mxu0
        %763 = vmatpush.bf16.msra.mxu0 %v654
        %764 = vmatpush.bf16.msra.mxu0 %v653
        %765 = vmatpush.bf16.msra.mxu0 %v652
        %766 = vmatpush.bf16.msra.mxu0 %v651
        %767 = vmatpush.bf16.msra.mxu0 %v650
        %768 = vmatpush.bf16.msra.mxu0 %v649
        %769 = vmatpush.bf16.msra.mxu0 %v648
        %770 = vmatpush.bf16.msra.mxu0 %v647
        %771 = vmatmul.bf16.gmra.mxu0 %v328
        %v772 = vpop.f32.mrf.mxu0
        %v773 = vadd.f32 %v754, %v772
        %v774 = vpop.f32.mrf.mxu0
        %v775 = vadd.f32 %v756, %v774
        %776 = vmatmul.bf16.gmra.mxu0 %v335
        %v777 = vpop.f32.mrf.mxu0
        %v778 = vadd.f32 %v759, %v777
        %v779 = vpop.f32.mrf.mxu0
        %v780 = vadd.f32 %v761, %v779
        %781 = vdwg.mxu0
        %782 = vmatpush.bf16.msra.mxu0 %v662
        %783 = vmatpush.bf16.msra.mxu0 %v661
        %784 = vmatpush.bf16.msra.mxu0 %v660
        %785 = vmatpush.bf16.msra.mxu0 %v659
        %786 = vmatpush.bf16.msra.mxu0 %v658
        %787 = vmatpush.bf16.msra.mxu0 %v657
        %788 = vmatpush.bf16.msra.mxu0 %v656
        %789 = vmatpush.bf16.msra.mxu0 %v655
        %790 = vmatmul.bf16.gmra.mxu0 %v329
        %v791 = vpop.f32.mrf.mxu0
        %v792 = vadd.f32 %v773, %v791
        %v793 = vpop.f32.mrf.mxu0
        %v794 = vadd.f32 %v775, %v793
        %795 = vmatmul.bf16.gmra.mxu0 %v336
        %v796 = vpop.f32.mrf.mxu0
        %v797 = vadd.f32 %v778, %v796
        %v798 = vpop.f32.mrf.mxu0
        %v799 = vadd.f32 %v780, %v798
        %800 = vdwg.mxu0
        %801 = vmatpush.bf16.msra.mxu0 %v670
        %802 = vmatpush.bf16.msra.mxu0 %v669
        %803 = vmatpush.bf16.msra.mxu0 %v668
        %804 = vmatpush.bf16.msra.mxu0 %v667
        %805 = vmatpush.bf16.msra.mxu0 %v666
        %806 = vmatpush.bf16.msra.mxu0 %v665
        %807 = vmatpush.bf16.msra.mxu0 %v664
        %808 = vmatpush.bf16.msra.mxu0 %v663
        %809 = vmatmul.bf16.gmra.mxu0 %v330
        %v810 = vpop.f32.mrf.mxu0
        %v811 = vadd.f32 %v792, %v810
        %v812 = vpop.f32.mrf.mxu0
        %v813 = vadd.f32 %v794, %v812
        %814 = vmatmul.bf16.gmra.mxu0 %v337
        %v815 = vpop.f32.mrf.mxu0
        %v816 = vadd.f32 %v797, %v815
        %v817 = vpop.f32.mrf.mxu0
        %v818 = vadd.f32 %v799, %v817
        %819 = vdwg.mxu0
        %820 = vmatpush.bf16.msra.mxu0 %v678
        %821 = vmatpush.bf16.msra.mxu0 %v677
        %822 = vmatpush.bf16.msra.mxu0 %v676
        %823 = vmatpush.bf16.msra.mxu0 %v675
        %824 = vmatpush.bf16.msra.mxu0 %v674
        %825 = vmatpush.bf16.msra.mxu0 %v673
        %826 = vmatpush.bf16.msra.mxu0 %v672
        %827 = vmatpush.bf16.msra.mxu0 %v671
        %828 = vmatmul.bf16.gmra.mxu0 %v331
        %v829 = vpop.f32.mrf.mxu0
        %v830 = vadd.f32 %v811, %v829
        %v831 = vpop.f32.mrf.mxu0
        %v832 = vadd.f32 %v813, %v831
        %833 = vmatmul.bf16.gmra.mxu0 %v338
        %v834 = vpop.f32.mrf.mxu0
        %v835 = vadd.f32 %v816, %v834
        %v836 = vpop.f32.mrf.mxu0
        %v837 = vadd.f32 %v818, %v836
        %838 = vdwg.mxu0
        %839 = vmatpush.bf16.msra.mxu0 %v686
        %840 = vmatpush.bf16.msra.mxu0 %v685
        %841 = vmatpush.bf16.msra.mxu0 %v684
        %842 = vmatpush.bf16.msra.mxu0 %v683
        %843 = vmatpush.bf16.msra.mxu0 %v682
        %844 = vmatpush.bf16.msra.mxu0 %v681
        %845 = vmatpush.bf16.msra.mxu0 %v680
        %846 = vmatpush.bf16.msra.mxu0 %v679
        %847 = vmatmul.bf16.gmra.mxu0 %v332
        %v848 = vpop.f32.mrf.mxu0
        %v849 = vadd.f32 %v830, %v848
        %v850 = vpop.f32.mrf.mxu0
        %v851 = vadd.f32 %v832, %v850
        %852 = vmatmul.bf16.gmra.mxu0 %v339
        %v853 = vpop.f32.mrf.mxu0
        %v854 = vadd.f32 %v835, %v853
        %v855 = vpop.f32.mrf.mxu0
        %v856 = vadd.f32 %v837, %v855
        %857 = vdwg.mxu0
        %858 = vmatpush.bf16.msra.mxu0 0
        %859 = vmatpush.bf16.msra.mxu0 0
        %860 = vmatpush.bf16.msra.mxu0 0
        %861 = vmatpush.bf16.msra.mxu0 0
        %862 = vmatpush.bf16.msra.mxu0 0
        %863 = vmatpush.bf16.msra.mxu0 0
        %864 = vmatpush.bf16.msra.mxu0 0
        %865 = vmatpush.bf16.msra.mxu0 %v687
        %866 = vmatmul.bf16.gmra.mxu0 %v739
        %v867 = vpop.f32.mrf.mxu0
        %v868 = vadd.f32 %v849, %v867
        %v869 = vpop.f32.mrf.mxu0
        %v870 = vadd.f32 %v851, %v869
        %871 = vmatmul.bf16.gmra.mxu0 %v742
        %v872 = vpop.f32.mrf.mxu0
        %v873 = vadd.f32 %v854, %v872
        %v874 = vpop.f32.mrf.mxu0
        %v875 = vadd.f32 %v856, %v874
        %876 = vdwg.mxu0
        %v877 = vmax.f32 %v868, 0.0
        %v878 = vmax.f32 %v870, 0.0
        %v879 = vmax.f32 %v873, 0.0
        %v880 = vmax.f32 %v875, 0.0
        %v881 = vpack.c.bf16 %v878, %v877
        %v882 = vpack.c.bf16 %v880, %v879
        %v883 = vld [vmem:[#allocation7] sm:$0xf]
        %v884 = vld [vmem:[#allocation7 + $0x4] sm:$0xf]
        %v885 = vld [vmem:[#allocation7 + $0x8] sm:$0xf]
        %v886 = vld [vmem:[#allocation7 + $0xc] sm:$0xf]
        %v887 = vld [vmem:[#allocation7 + $0x10] sm:$0xf]
        %v888 = vld [vmem:[#allocation7 + $0x14] sm:$0xf]
        %v889 = vld [vmem:[#allocation7 + $0x18] sm:$0xf]
        %v890 = vld [vmem:[#allocation7 + $0x1c] sm:$0xf]
        %v891 = vld [vmem:[#allocation7 + $0x20] sm:$0xf]
        %v892 = vld [vmem:[#allocation7 + $0x24] sm:$0xf]
        %v893 = vld [vmem:[#allocation7 + $0x28] sm:$0xf]
        %v894 = vld [vmem:[#allocation7 + $0x2c] sm:$0xf]
        %v895 = vld [vmem:[#allocation7 + $0x30] sm:$0xf]
        %v896 = vld [vmem:[#allocation7 + $0x34] sm:$0xf]
        %v897 = vld [vmem:[#allocation7 + $0x38] sm:$0xf]
        %v898 = vld [vmem:[#allocation7 + $0x3c] sm:$0xf]
        %v899 = vld [vmem:[%s4] sm:$0x1]
        %v901 = vperm.slane %v899, 0
        %v919 = vunpack.c.l.b16 %v883
        %v920 = vunpack.c.l.b16 %v884
        %v921 = vunpack.c.l.b16 %v885
        %v922 = vunpack.c.l.b16 %v886
        %v923 = vunpack.c.l.b16 %v887
        %v924 = vunpack.c.l.b16 %v888
        %v925 = vunpack.c.l.b16 %v889
        %v926 = vunpack.c.l.b16 %v890
        %v927 = vunpack.c.l.b16 %v891
        %v928 = vunpack.c.l.b16 %v892
        %v929 = vunpack.c.l.b16 %v893
        %v930 = vunpack.c.l.b16 %v894
        %v931 = vunpack.c.l.b16 %v895
        %v932 = vunpack.c.l.b16 %v896
        %v933 = vunpack.c.l.b16 %v897
        %v934 = vunpack.c.l.b16 %v898
        %v935 = vpack.c.b16 %v920, %v919
        %v936 = vpack.c.b16 %v922, %v921
        %v937 = vpack.c.b16 %v924, %v923
        %v938 = vpack.c.b16 %v926, %v925
        %v939 = vpack.c.b16 %v928, %v927
        %v940 = vpack.c.b16 %v930, %v929
        %v941 = vpack.c.b16 %v932, %v931
        %v942 = vpack.c.b16 %v934, %v933
        %951 = vmatpush.bf16.msra.mxu0 %v942
        %952 = vmatpush.bf16.msra.mxu0 %v941
        %953 = vmatpush.bf16.msra.mxu0 %v940
        %954 = vmatpush.bf16.msra.mxu0 %v939
        %955 = vmatpush.bf16.msra.mxu0 %v938
        %956 = vmatpush.bf16.msra.mxu0 %v937
        %957 = vmatpush.bf16.msra.mxu0 %v936
        %958 = vmatpush.bf16.msra.mxu0 %v935
        %959 = vmatmul.bf16.gmra.mxu0 %v881
        %v960 = vpop.f32.mrf.mxu0
        %v961 = vadd.f32 %v901, %v960
        %v962 = vpop.f32.mrf.mxu0
        %v963 = vadd.f32 %v901, %v962
        %964 = vmatmul.bf16.gmra.mxu0 %v882
        %v965 = vpop.f32.mrf.mxu0
        %v966 = vadd.f32 %v901, %v965
        %v967 = vpop.f32.mrf.mxu0
        %v968 = vadd.f32 %v901, %v967
        %969 = vdwg.mxu0
        %970 = vst [vmem:[%s296] sm:$0xff] %v961
        %971 = vst [vmem:[%s296 + $0x8] sm:$0xff] %v963
        %972 = vst [vmem:[%s296 + $0x10] sm:$0xff] %v966
        %973 = vst [vmem:[%s296 + $0x18] sm:$0xff] %v968
        %s974 = smul.u32 4, %s21
        %p975 = scmp.lt.s32.totalorder %s974, 7
        %s976 = scalar_select %p975, %s974, 7
        %s977 = smul.addr %s976, 8
        %s978 = scalar_lea.vmem %s5, %s977
        // Predicated region
        $region57: #{_lambda_.1} parent=39 // pred_check
          %p979 = pneg %p149
        $region58: #{_lambda_.1} parent=39 // pred_check_branch
          %981 = sbr.rel (%p979) target = $region60
        $region59: #{_lambda_.1} parent=39 // pred_region
          %s982 = smul.u32 4, %s21
        $region60: #{_lambda_.1} parent=39 // pred_fallthru
          _
      $region40: #{_lambda_.1} parent=5 // pred_fallthru
        _
      %p983 = scmp.le.s32.totalorder 2, %s16
      // Predicated region
      $region61: #{_lambda_.1} parent=5 // pred_check
        %p984 = pneg %p983
      $region62: #{_lambda_.1} parent=5 // pred_check_branch
        %986 = sbr.rel (%p984) target = $region64
      $region63: #{_lambda_.1} parent=5 // pred_region
        %s987 = ssub.s32 %s16, 2
        // Predicated region
        $region65: #{_lambda_.1} parent=63 // pred_check
          %p988 = pneg %p155
        $region66: #{_lambda_.1} parent=63 // pred_check_branch
          %990 = sbr.rel (%p988) target = $region68
        $region67: #{_lambda_.1} parent=63 // pred_region
          %s991 = smul.u32 4, %s22
          %p992 = scmp.lt.s32.totalorder %s991, 7
          %s993 = scalar_select %p992, %s991, 7
          %s994 = smul.addr %s993, 8
          %s995 = scalar_lea.vmem %s5, %s994
        $region68: #{_lambda_.1} parent=63 // pred_fallthru
          _
      $region64: #{_lambda_.1} parent=5 // pred_fallthru
        _
    $region6: #{_lambda_.1} parent=1 // loop_footer
      %s20 = sadd.s32 1, %s16
    $region7: #{_lambda_.1} parent=1 // loop_footer_branch
      %15 = sbr.rel target = $region3
    $region8: #{_lambda_.1} parent=1 // loop_exit
      _
    %996 = vsyncpa [#allocation3], 1
    %s997 = scalar_lea.sflag [#allocation3], 1
    %998 = vsyncpa %s997, 1
    %999 = vsyncpa [#allocation5], 1
    %1000 = vsyncpa [#allocation8], 1

</llo_original>
